<compile_context>
chip_gen: v7x
topology: tpu7x:2x2x1
jax: 0.10.0
libtpu: 0.0.40
codegen_flags: <defaults>
</compile_context>

<pallas_src>
import functools

import jax
import jax.numpy as jnp
from jax.experimental import pallas as pl
from jax.experimental.pallas import tpu as pltpu

_LANES = 128


def _sublane_multiple(dtype) -> int:
    """Native sublane tile for a dtype: 8 (32-bit), 16 (16-bit), 32 (8-bit)."""
    return max(8, 32 // jnp.dtype(dtype).itemsize)


def _default_num_splits() -> int:
    """2 on chips with two TensorCores per chip, else 1."""
    try:
        kind = jax.devices()[0].device_kind.lower()
    except Exception:  # pragma: no cover - defensive
        return 1
    return 2 if any(tag in kind for tag in ("v4", "v5p", "v7")) else 1


def _dice_kernel(x_ref, t_ref, inter_ref, s_ref, tsum_ref, *,
                 steps, block_rows, last_block, tail_valid):
    split = pl.program_id(0)
    step = pl.program_id(1)
    block_idx = split * steps + step

    @pl.when(step == 0)
    def _init():
        inter_ref[...] = jnp.zeros_like(inter_ref)
        s_ref[...] = jnp.zeros_like(s_ref)
        tsum_ref[...] = jnp.zeros_like(tsum_ref)

    x = x_ref[...].astype(jnp.float32)
    t = t_ref[...].astype(jnp.float32)
    sg = jax.nn.sigmoid(x)  # transcendental -> EUP slot

    def _accumulate(sg_v, t_v):
        # Per-lane partial sums (sublane reduce -> XLU), accumulated directly
        # into the VMEM-resident output blocks across the sequential axis.
        inter_ref[...] += jnp.sum(sg_v * t_v, axis=0, keepdims=True)
        s_ref[...] += jnp.sum(sg_v, axis=0, keepdims=True)
        tsum_ref[...] += jnp.sum(t_v, axis=0, keepdims=True)

    if tail_valid is None:
        # Every block is completely valid: no masking anywhere.
        _accumulate(sg, t)
    else:
        @pl.when(block_idx != last_block)
        def _full_block():
            _accumulate(sg, t)

        @pl.when(block_idx == last_block)
        def _tail_block():
            # Mask garbage rows (Pallas partial last block) and padded lanes
            # in one shot; only this single block pays the extra VALU ops.
            rows_i = jax.lax.broadcasted_iota(jnp.int32, (block_rows, _LANES), 0)
            lanes_i = jax.lax.broadcasted_iota(jnp.int32, (block_rows, _LANES), 1)
            valid = rows_i * _LANES + lanes_i < tail_valid
            _accumulate(jnp.where(valid, sg, 0.0), jnp.where(valid, t, 0.0))


def dice_loss_pallas(inputs, targets, smooth=1.0, *, block_rows=4096,
                     num_splits=None):
    """Equivalent of DiceLoss.forward(inputs, targets, smooth)."""
    x = inputs.reshape(-1)
    t = targets.reshape(-1)
    n = x.shape[0]
    if n == 0:
        # dice = smooth / smooth = 1 -> loss 0
        return jnp.float32(0.0)

    if num_splits is None:
        num_splits = _default_num_splits()

    # Lane-dense (rows, 128) view.  When n % 128 == 0 this reshape is a free
    # bitcast (no extra HBM pass).  Otherwise only the < 128-element lane tail
    # forces a pad (value irrelevant: masked in-kernel).
    rem = n % _LANES
    if rem:
        # TODO(synk): the pad still materializes a copy of the flat array for
        # non-lane-aligned sizes; segmentation tensors are normally aligned.
        x = jnp.pad(x, (0, _LANES - rem))
        t = jnp.pad(t, (0, _LANES - rem))
    rows = (n + _LANES - 1) // _LANES
    x = x.reshape(rows, _LANES)
    t = t.reshape(rows, _LANES)

    # Align the row tile to the widest dtype packing so DMAs stay unmasked.
    align = max(_sublane_multiple(x.dtype), _sublane_multiple(t.dtype))
    block_rows = max(align, (block_rows // align) * align)
    if rows <= block_rows:
        block_rows = rows  # single full-extent block (always a legal tile)

    num_blocks = pl.cdiv(rows, block_rows)
    # Only split when it shards cleanly (2 TCs on v4/v5p/v7x); otherwise a
    # split would just add padding and accumulator churn.
    splits = num_splits if (num_splits > 1 and num_blocks % num_splits == 0) else 1
    steps = num_blocks // splits

    block_span = block_rows * _LANES
    if num_blocks * block_span == n:
        last_block, tail_valid = num_blocks - 1, None
    else:
        last_block = num_blocks - 1
        tail_valid = n - last_block * block_span  # valid elems in last block

    kernel = functools.partial(
        _dice_kernel, steps=steps, block_rows=block_rows,
        last_block=last_block, tail_valid=tail_valid)

    in_spec = pl.BlockSpec((block_rows, _LANES), lambda s, i: (s * steps + i, 0))
    out_spec = pl.BlockSpec((1, _LANES), lambda s, i: (s, 0))
    partial_shape = jax.ShapeDtypeStruct((splits, _LANES), jnp.float32)

    inter, s_sum, t_sum = pl.pallas_call(
        kernel,
        out_shape=(partial_shape, partial_shape, partial_shape),
        grid_spec=pltpu.PrefetchScalarGridSpec(
            num_scalar_prefetch=0,
            grid=(splits, steps),
            in_specs=[in_spec, in_spec],
            out_specs=[out_spec, out_spec, out_spec],
        ),
        compiler_params=pltpu.CompilerParams(
            dimension_semantics=("parallel", "arbitrary"),
            vmem_limit_bytes=48 << 20,
        ),
    )(x, t)

    # Final combine done exactly once (smooth never double-counted).
    intersection = jnp.sum(inter)
    denom = jnp.sum(s_sum) + jnp.sum(t_sum) + smooth
    dice = (2.0 * intersection + smooth) / denom
    return 1.0 - dice


def dice_loss_ref(inputs, targets, smooth=1.0):
    s = jax.nn.sigmoid(inputs.reshape(-1).astype(jnp.float32))
    t = targets.reshape(-1).astype(jnp.float32)
    intersection = jnp.sum(s * t)
    dice = (2.0 * intersection + smooth) / (jnp.sum(s) + jnp.sum(t) + smooth)
    return 1.0 - dice


if __name__ == "__main__":
    key = jax.random.PRNGKey(0)
    k1, k2, k3, k4, k5, k6 = jax.random.split(key, 6)

    # 1) Small f32 segmentation logits / binary mask pair (single block path).
    inputs = jax.random.normal(k1, (2, 4, 16, 16), dtype=jnp.float32)
    targets = jax.random.bernoulli(k2, p=0.3, shape=(2, 4, 16, 16)).astype(
        jnp.float32)
    loss = jax.block_until_ready(dice_loss_pallas(inputs, targets, smooth=1.0))
    ref = dice_loss_ref(inputs, targets, smooth=1.0)
    assert jnp.allclose(loss, ref, atol=1e-5, rtol=1e-5), (loss, ref)

    # 2) Narrow dtypes straight from HBM (bf16 logits, uint8 mask),
    #    multi-block + 2-way split path.
    big_in = jax.random.normal(k3, (4, 8, 32, 32), dtype=jnp.bfloat16)
    big_tg = jax.random.bernoulli(k4, p=0.4, shape=(4, 8, 32, 32)).astype(
        jnp.uint8)
    loss2 = jax.block_until_ready(
        dice_loss_pallas(big_in, big_tg, smooth=1.0, block_rows=64,
                         num_splits=2))
    ref2 = dice_loss_ref(big_in, big_tg, smooth=1.0)
    assert jnp.allclose(loss2, ref2, atol=1e-5, rtol=1e-5), (loss2, ref2)

    # 3) Non-lane-aligned size (lane-tail + partial-block mask path).
    odd_in = jax.random.normal(k5, (3, 5, 37, 41), dtype=jnp.float32)
    odd_tg = jax.random.bernoulli(k6, p=0.4, shape=(3, 5, 37, 41)).astype(
        jnp.float32)
    loss3 = jax.block_until_ready(
        dice_loss_pallas(odd_in, odd_tg, smooth=1.0, block_rows=64))
    ref3 = dice_loss_ref(odd_in, odd_tg, smooth=1.0)
    assert jnp.allclose(loss3, ref3, atol=1e-5, rtol=1e-5), (loss3, ref3)

    print("KERNEL_OK")
</pallas_src>

<mosaic_0001>
module attributes {stable_mosaic.version = 11 : i64} {
  func.func @_dice_kernel(%arg0: i32, %arg1: i32, %arg2: memref<16x128xf32, #tpu.memory_space<vmem>>, %arg3: memref<16x128xf32, #tpu.memory_space<vmem>>, %arg4: memref<1x128xf32, #tpu.memory_space<vmem>>, %arg5: memref<1x128xf32, #tpu.memory_space<vmem>>, %arg6: memref<1x128xf32, #tpu.memory_space<vmem>>) attributes {dimension_semantics = [#tpu.dimension_semantics<parallel>, #tpu.dimension_semantics<arbitrary>], iteration_bounds = array<i64: 1, 1>, scalar_prefetch = 0 : i64, scratch_operands = 0 : i64, tpu.core_type = #tpu.core_type<tc>, window_params = [{transform_indices = @transform_0, window_bounds = array<i64: 16, 128>}, {transform_indices = @transform_1, window_bounds = array<i64: 16, 128>}, {transform_indices = @transform_2, window_bounds = array<i64: 1, 128>}, {transform_indices = @transform_3, window_bounds = array<i64: 1, 128>}, {transform_indices = @transform_4, window_bounds = array<i64: 1, 128>}]} {
    %c0_i32 = arith.constant 0 : i32
    %0 = arith.cmpi eq, %arg1, %c0_i32 : i32
    %1 = arith.extui %0 : i1 to i32
    %c0_i32_0 = arith.constant 0 : i32
    %2 = arith.cmpi ne, %1, %c0_i32_0 : i32
    scf.if %2 {
      %cst_19 = arith.constant 0.000000e+00 : f32
      %26 = vector.broadcast %cst_19 : f32 to vector<1x128xf32>
      %c0_20 = arith.constant 0 : index
      %c0_21 = arith.constant 0 : index
      %27 = vector.load %arg4[%c0_20, %c0_21] : memref<1x128xf32, #tpu.memory_space<vmem>>, vector<1x128xf32>
      tpu.vector_store %arg4[%c0_20, %c0_21], %26 {strides = array<i32>} : memref<1x128xf32, #tpu.memory_space<vmem>>, vector<1x128xf32>,
      %cst_22 = arith.constant 0.000000e+00 : f32
      %28 = vector.broadcast %cst_22 : f32 to vector<1x128xf32>
      %c0_23 = arith.constant 0 : index
      %c0_24 = arith.constant 0 : index
      %29 = vector.load %arg5[%c0_23, %c0_24] : memref<1x128xf32, #tpu.memory_space<vmem>>, vector<1x128xf32>
      tpu.vector_store %arg5[%c0_23, %c0_24], %28 {strides = array<i32>} : memref<1x128xf32, #tpu.memory_space<vmem>>, vector<1x128xf32>,
      %cst_25 = arith.constant 0.000000e+00 : f32
      %30 = vector.broadcast %cst_25 : f32 to vector<1x128xf32>
      %c0_26 = arith.constant 0 : index
      %c0_27 = arith.constant 0 : index
      %31 = vector.load %arg6[%c0_26, %c0_27] : memref<1x128xf32, #tpu.memory_space<vmem>>, vector<1x128xf32>
      tpu.vector_store %arg6[%c0_26, %c0_27], %30 {strides = array<i32>} : memref<1x128xf32, #tpu.memory_space<vmem>>, vector<1x128xf32>,
    } else {
    }
    %c0 = arith.constant 0 : index
    %c0_1 = arith.constant 0 : index
    %3 = vector.load %arg2[%c0, %c0_1] : memref<16x128xf32, #tpu.memory_space<vmem>>, vector<16x128xf32>
    %c0_2 = arith.constant 0 : index
    %c0_3 = arith.constant 0 : index
    %4 = vector.load %arg3[%c0_2, %c0_3] : memref<16x128xf32, #tpu.memory_space<vmem>>, vector<16x128xf32>
    %5 = arith.negf %3 : vector<16x128xf32>
    %6 = math.exp %5 : vector<16x128xf32>
    %cst = arith.constant 1.000000e+00 : f32
    %7 = vector.broadcast %cst : f32 to vector<16x128xf32>
    %8 = arith.addf %7, %6 : vector<16x128xf32>
    %9 = arith.divf %7, %8 : vector<16x128xf32>
    %c0_4 = arith.constant 0 : index
    %c0_5 = arith.constant 0 : index
    %10 = vector.load %arg4[%c0_4, %c0_5] : memref<1x128xf32, #tpu.memory_space<vmem>>, vector<1x128xf32>
    %11 = arith.mulf %9, %4 : vector<16x128xf32>
    %cst_6 = arith.constant dense<0.000000e+00> : vector<128xf32>
    %12 = vector.multi_reduction <add>, %11, %cst_6 [0] : vector<16x128xf32> to vector<128xf32>
    %13 = vector.shape_cast %12 : vector<128xf32> to vector<1x128xf32>
    %14 = arith.addf %10, %13 : vector<1x128xf32>
    %c0_7 = arith.constant 0 : index
    %c0_8 = arith.constant 0 : index
    %15 = vector.load %arg4[%c0_7, %c0_8] : memref<1x128xf32, #tpu.memory_space<vmem>>, vector<1x128xf32>
    tpu.vector_store %arg4[%c0_7, %c0_8], %14 {strides = array<i32>} : memref<1x128xf32, #tpu.memory_space<vmem>>, vector<1x128xf32>,
    %c0_9 = arith.constant 0 : index
    %c0_10 = arith.constant 0 : index
    %16 = vector.load %arg5[%c0_9, %c0_10] : memref<1x128xf32, #tpu.memory_space<vmem>>, vector<1x128xf32>
    %cst_11 = arith.constant dense<0.000000e+00> : vector<128xf32>
    %17 = vector.multi_reduction <add>, %9, %cst_11 [0] : vector<16x128xf32> to vector<128xf32>
    %18 = vector.shape_cast %17 : vector<128xf32> to vector<1x128xf32>
    %19 = arith.addf %16, %18 : vector<1x128xf32>
    %c0_12 = arith.constant 0 : index
    %c0_13 = arith.constant 0 : index
    %20 = vector.load %arg5[%c0_12, %c0_13] : memref<1x128xf32, #tpu.memory_space<vmem>>, vector<1x128xf32>
    tpu.vector_store %arg5[%c0_12, %c0_13], %19 {strides = array<i32>} : memref<1x128xf32, #tpu.memory_space<vmem>>, vector<1x128xf32>,
    %c0_14 = arith.constant 0 : index
    %c0_15 = arith.constant 0 : index
    %21 = vector.load %arg6[%c0_14, %c0_15] : memref<1x128xf32, #tpu.memory_space<vmem>>, vector<1x128xf32>
    %cst_16 = arith.constant dense<0.000000e+00> : vector<128xf32>
    %22 = vector.multi_reduction <add>, %4, %cst_16 [0] : vector<16x128xf32> to vector<128xf32>
    %23 = vector.shape_cast %22 : vector<128xf32> to vector<1x128xf32>
    %24 = arith.addf %21, %23 : vector<1x128xf32>
    %c0_17 = arith.constant 0 : index
    %c0_18 = arith.constant 0 : index
    %25 = vector.load %arg6[%c0_17, %c0_18] : memref<1x128xf32, #tpu.memory_space<vmem>>, vector<1x128xf32>
    tpu.vector_store %arg6[%c0_17, %c0_18], %24 {strides = array<i32>} : memref<1x128xf32, #tpu.memory_space<vmem>>, vector<1x128xf32>,
    return
  }
  func.func @transform_0(%arg0: i32, %arg1: i32) -> (i32, i32) {
    %c1_i32 = arith.constant 1 : i32
    %0 = arith.muli %arg0, %c1_i32 : i32
    %1 = arith.addi %0, %arg1 : i32
    %c0_i32 = arith.constant 0 : i32
    %c0_i32_0 = arith.constant 0 : i32
    return %1, %c0_i32 : i32, i32
  }
  func.func @transform_1(%arg0: i32, %arg1: i32) -> (i32, i32) {
    %c1_i32 = arith.constant 1 : i32
    %0 = arith.muli %arg0, %c1_i32 : i32
    %1 = arith.addi %0, %arg1 : i32
    %c0_i32 = arith.constant 0 : i32
    %c0_i32_0 = arith.constant 0 : i32
    return %1, %c0_i32 : i32, i32
  }
  func.func @transform_2(%arg0: i32, %arg1: i32) -> (i32, i32) {
    %c0_i32 = arith.constant 0 : i32
    %c0_i32_0 = arith.constant 0 : i32
    return %arg0, %c0_i32 : i32, i32
  }
  func.func @transform_3(%arg0: i32, %arg1: i32) -> (i32, i32) {
    %c0_i32 = arith.constant 0 : i32
    %c0_i32_0 = arith.constant 0 : i32
    return %arg0, %c0_i32 : i32, i32
  }
  func.func @transform_4(%arg0: i32, %arg1: i32) -> (i32, i32) {
    %c0_i32 = arith.constant 0 : i32
    %c0_i32_0 = arith.constant 0 : i32
    return %arg0, %c0_i32 : i32, i32
  }
}

</mosaic_0001>

<llo_original>
// kernel: tpu_custom_call.1
$region0: #{tpu_custom_call.1}
  #allocation0 [shape = 'u32[]', space=smem, size = 0x4, offset = 0x4, fixed_abs, tag = 'smem constant byte address 0x4 - core index']
  #allocation1 [shape = 'u32[144,128]{1,0:T(1,128)}', space=vmem, size = 0x12000, scoped, tag = 'internal scratch']
  %s0 = inlined_call_operand.hbm [shape: f32[16,128], index: 0, kind: input, shape index: {}]
  %s1 = inlined_call_operand.hbm [shape: f32[16,128], index: 1, kind: input, shape index: {}]
  %s2 = inlined_call_operand.hbm [shape: f32[1,128], index: 2, kind: output, shape index: {0}]
  %s3 = inlined_call_operand.hbm [shape: f32[1,128], index: 3, kind: output, shape index: {1}]
  %s4 = inlined_call_operand.hbm [shape: f32[1,128], index: 4, kind: output, shape index: {2}]
  %5 = xla_tuple %s2, %s3, %s4
  %s6 = sld [smem:[#allocation0]]
  $region46: #{tpu_custom_call.1} parent=0
    _
  %s8 = ssub.s32 1, %s6
  %s9 = scalar_select 0, %s8, %s6
  $region1: #{tpu_custom_call.1} parent=0
    #allocation2 [shape = 'u8[8192]{0}', space=vmem, size = 0x2000, scoped, tag = 'input window, operand 0, single buffered']
    #allocation3 [shape = 's32[1]{0}', space=sflag, size = 0x4, scoped, tag = 'scoped memory for tpu_custom_call.1']
    #allocation4 [shape = 's32[1]{0}', space=sflag, size = 0x4, scoped, tag = 'scoped memory for tpu_custom_call.1']
    #allocation5 [shape = 'u8[8192]{0}', space=vmem, size = 0x2000, scoped, tag = 'input window, operand 1, single buffered']
    #allocation6 [shape = 's32[1]{0}', space=sflag, size = 0x4, scoped, tag = 'scoped memory for tpu_custom_call.1']
    #allocation7 [shape = 'u8[512]{0}', space=vmem, size = 0x400, scoped, tag = 'output window, operand 0, single buffered']
    #allocation8 [shape = 'u8[512]{0}', space=vmem, size = 0x400, scoped, tag = 'output window, operand 1, single buffered']
    #allocation9 [shape = 's32[1]{0}', space=sflag, size = 0x4, scoped, tag = 'scoped memory for tpu_custom_call.1']
    #allocation10 [shape = 'u8[512]{0}', space=vmem, size = 0x400, scoped, tag = 'output window, operand 2, single buffered']
    %10 = vsyncpa [#allocation3], 0
    %11 = vsyncpa [#allocation6], 0
    %12 = vsyncpa [#allocation4], 0
    %13 = vsyncpa [#allocation9], 0
    // Predicated region
    $region2: #{tpu_custom_call.1} parent=1 // pred_check
      _
    $region3: #{tpu_custom_call.1} parent=1 // pred_check_branch
      %15 = sbr.rel (0) target = $region5
    $region4: #{tpu_custom_call.1} parent=1 // pred_region
      %s16 = sadd.s32 0, 0
      %s17 = smul.u32 2, %s16
      %s19 = ssub.s32 256, 256
      %20 = vsyncadd [#allocation3], %s19
      %s21 = smul.addr %s17, 128
      %s22 = scalar_lea.hbm %s0, %s21
      %s23 = sshll.u32 [#allocation2], 4
      %s24 = int_to_ptr.vmem [resolvable:$true] %s23
      %29 = dma.hbm_to_vmem [thread:$0]  %s22, 256, %s24, [#allocation3], 128, 128, 8
    $region5: #{tpu_custom_call.1} parent=1 // pred_fallthru
      _
    // Predicated region
    $region6: #{tpu_custom_call.1} parent=1 // pred_check
      _
    $region7: #{tpu_custom_call.1} parent=1 // pred_check_branch
      %31 = sbr.rel (0) target = $region9
    $region8: #{tpu_custom_call.1} parent=1 // pred_region
      %s32 = sadd.s32 0, 0
      %s33 = smul.u32 2, %s32
      %s35 = ssub.s32 256, 256
      %36 = vsyncadd [#allocation6], %s35
      %s37 = smul.addr %s33, 128
      %s38 = scalar_lea.hbm %s1, %s37
      %s39 = sshll.u32 [#allocation5], 4
      %s40 = int_to_ptr.vmem [resolvable:$true] %s39
      %45 = dma.hbm_to_vmem [thread:$0]  %s38, 256, %s40, [#allocation6], 128, 128, 8
    $region9: #{tpu_custom_call.1} parent=1 // pred_fallthru
      _
    // Predicated region
    $region10: #{tpu_custom_call.1} parent=1 // pred_check
      _
    $region11: #{tpu_custom_call.1} parent=1 // pred_check_branch
      %47 = sbr.rel (0) target = $region13
    $region12: #{tpu_custom_call.1} parent=1 // pred_region
      %48 = dma.done [#allocation3], 256
    $region13: #{tpu_custom_call.1} parent=1 // pred_fallthru
      _
    // Predicated region
    $region14: #{tpu_custom_call.1} parent=1 // pred_check
      _
    $region15: #{tpu_custom_call.1} parent=1 // pred_check_branch
      %50 = sbr.rel (0) target = $region17
    $region16: #{tpu_custom_call.1} parent=1 // pred_region
      %51 = dma.done [#allocation6], 256
    $region17: #{tpu_custom_call.1} parent=1 // pred_fallthru
      _
    %s52 = sadd.s32 0, 0
    %s53 = smul.u32 2, %s52
    %s54 = sadd.s32 0, 0
    %s55 = smul.u32 2, %s54
    %p56 = scmp.eq.s32.totalorder 0, 0
    // Predicated region
    $region18: #{tpu_custom_call.1} parent=1 // pred_check
      %p57 = pneg %p56
    $region19: #{tpu_custom_call.1} parent=1 // pred_check_branch
      %59 = sbr.rel (%p57) target = $region21
    $region20: #{tpu_custom_call.1} parent=1 // pred_region
      %60 = vst [vmem:[#allocation7] sm:$0x1] 0.0
      %61 = vst [vmem:[#allocation8] sm:$0x1] 0.0
      %62 = vst [vmem:[#allocation10] sm:$0x1] 0.0
    $region21: #{tpu_custom_call.1} parent=1 // pred_fallthru
      _
    %v63 = vld [vmem:[#allocation2] sm:$0xff]
    %v64 = vld [vmem:[#allocation2 + $0x8] sm:$0xff]
    %v65 = vld [vmem:[#allocation5] sm:$0xff]
    %v66 = vld [vmem:[#allocation5 + $0x8] sm:$0xff]
    %v67 = vxor.u32 %v63, 2147483648
    %v68 = vxor.u32 %v64, 2147483648
    %v69 = vmul.f32 %v67, 1.442695
    %v70 = vpow.pop %v69
    %v71 = vmul.f32 %v68, 1.442695
    %v72 = vpow.pop %v71
    %v73 = vadd.f32 %v70, 1.0
    %v74 = vadd.f32 %v72, 1.0
    %v75 = vrcp.pop %v73
    %v76 = vmul.f32 1.0, %v75
    %v77 = vrcp.pop %v74
    %v78 = vmul.f32 1.0, %v77
    %v79 = vld [vmem:[#allocation7] sm:$0x1]
    %v80 = vmul.f32 %v76, %v65
    %v81 = vmul.f32 %v78, %v66
    %v82 = vadd.f32 %v80, %v81
    %v83 = vrot.slane %v82, 4
    %v84 = vadd.f32 %v82, %v83
    %v85 = vrot.slane %v84, 2
    %v86 = vadd.f32 %v84, %v85
    %v87 = vrot.slane %v86, 1
    %v88 = vadd.f32 %v86, %v87
    %v89 = vadd.f32 %v79, %v88
    %90 = vst [vmem:[#allocation7] sm:$0x1] %v89
    %v91 = vld [vmem:[#allocation8] sm:$0x1]
    %v92 = vadd.f32 %v76, %v78
    %v93 = vrot.slane %v92, 4
    %v94 = vadd.f32 %v92, %v93
    %v95 = vrot.slane %v94, 2
    %v96 = vadd.f32 %v94, %v95
    %v97 = vrot.slane %v96, 1
    %v98 = vadd.f32 %v96, %v97
    %v99 = vadd.f32 %v91, %v98
    %100 = vst [vmem:[#allocation8] sm:$0x1] %v99
    %v101 = vld [vmem:[#allocation10] sm:$0x1]
    %v102 = vadd.f32 %v65, %v66
    %v103 = vrot.slane %v102, 4
    %v104 = vadd.f32 %v102, %v103
    %v105 = vrot.slane %v104, 2
    %v106 = vadd.f32 %v104, %v105
    %v107 = vrot.slane %v106, 1
    %v108 = vadd.f32 %v106, %v107
    %v109 = vadd.f32 %v101, %v108
    %110 = vst [vmem:[#allocation10] sm:$0x1] %v109
    // Predicated region
    $region22: #{tpu_custom_call.1} parent=1 // pred_check
      _
    $region23: #{tpu_custom_call.1} parent=1 // pred_check_branch
      %112 = sbr.rel (0) target = $region25
    $region24: #{tpu_custom_call.1} parent=1 // pred_region
      %s114 = ssub.s32 16, 16
      %115 = vsyncadd [#allocation4], %s114
      %s117 = sshll.u32 [#allocation7], 4
      %s118 = int_to_ptr.vmem [resolvable:$true] %s117
      %120 = dma.vmem_to_hbm [thread:$0]  %s118, 16, %s2, [#allocation4]
    $region25: #{tpu_custom_call.1} parent=1 // pred_fallthru
      _
    // Predicated region
    $region26: #{tpu_custom_call.1} parent=1 // pred_check
      _
    $region27: #{tpu_custom_call.1} parent=1 // pred_check_branch
      %122 = sbr.rel (0) target = $region29
    $region28: #{tpu_custom_call.1} parent=1 // pred_region
      %s124 = ssub.s32 16, 16
      %125 = vsyncadd [#allocation9], %s124
      %s127 = sshll.u32 [#allocation8], 4
      %s128 = int_to_ptr.vmem [resolvable:$true] %s127
      %130 = dma.vmem_to_hbm [thread:$0]  %s128, 16, %s3, [#allocation9]
    $region29: #{tpu_custom_call.1} parent=1 // pred_fallthru
      _
    // Predicated region
    $region30: #{tpu_custom_call.1} parent=1 // pred_check
      _
    $region31: #{tpu_custom_call.1} parent=1 // pred_check_branch
      %132 = sbr.rel (0) target = $region33
    $region32: #{tpu_custom_call.1} parent=1 // pred_region
      %s134 = ssub.s32 16, 16
      %135 = vsyncadd [#allocation9], %s134
      %s137 = sshll.u32 [#allocation10], 4
      %s138 = int_to_ptr.vmem [resolvable:$true] %s137
      %140 = dma.vmem_to_hbm [thread:$0]  %s138, 16, %s4, [#allocation9]
    $region33: #{tpu_custom_call.1} parent=1 // pred_fallthru
      _
    // Predicated region
    $region34: #{tpu_custom_call.1} parent=1 // pred_check
      _
    $region35: #{tpu_custom_call.1} parent=1 // pred_check_branch
      %142 = sbr.rel (0) target = $region37
    $region36: #{tpu_custom_call.1} parent=1 // pred_region
      %143 = dma.done [#allocation4], 16
    $region37: #{tpu_custom_call.1} parent=1 // pred_fallthru
      _
    // Predicated region
    $region38: #{tpu_custom_call.1} parent=1 // pred_check
      _
    $region39: #{tpu_custom_call.1} parent=1 // pred_check_branch
      %145 = sbr.rel (0) target = $region41
    $region40: #{tpu_custom_call.1} parent=1 // pred_region
      %146 = dma.done [#allocation9], 16
    $region41: #{tpu_custom_call.1} parent=1 // pred_fallthru
      _
    // Predicated region
    $region42: #{tpu_custom_call.1} parent=1 // pred_check
      _
    $region43: #{tpu_custom_call.1} parent=1 // pred_check_branch
      %148 = sbr.rel (0) target = $region45
    $region44: #{tpu_custom_call.1} parent=1 // pred_region
      %149 = dma.done [#allocation9], 16
    $region45: #{tpu_custom_call.1} parent=1 // pred_fallthru
      _
    %150 = vsyncpa [#allocation3], 1
    %151 = vsyncpa [#allocation6], 1
    %152 = vsyncpa [#allocation4], 1
    %153 = vsyncpa [#allocation9], 1

</llo_original>
